<compile_context>
chip_gen: v7x
topology: tpu7x:2x2x1
jax: 0.10.0
libtpu: 0.0.40
codegen_flags: <defaults>
</compile_context>

<pallas_src>
import functools

import jax
import jax.numpy as jnp
from jax.experimental import pallas as pl
from jax.experimental.pallas import tpu as pltpu


_DEFAULT_BLOCK_BYTES = 2 * 1024 * 1024      # 2 MiB blocks -> ~8 MiB double-buffered in+out
_LANE_CANDIDATES = (1024, 512, 256, 128)


# ---------------------------------------------------------------------------
# Fused kernel: grid = (phase, tile)
# ---------------------------------------------------------------------------
def _fused_kernel(p_ref, x_ref, o_ref,
                  acc1_ref, acc2_ref, shift_ref, mean_ref, istd_ref,
                  *, inv_n, inv_nm1, n_pad):
    phase = pl.program_id(0)
    i = pl.program_id(1)

    # ---- phase 0: pilot-shifted sum / sum-of-squares accumulation -----------
    @pl.when(phase == 0)
    def _reduce():
        x = x_ref[...]

        @pl.when(i == 0)
        def _init():
            shift_ref[...] = x[0:1, 0:1]                 # pilot center (first element)
            acc1_ref[...] = jnp.zeros_like(acc1_ref)
            acc2_ref[...] = jnp.zeros_like(acc2_ref)

        xs = x - shift_ref[...]
        r, l = xs.shape
        xr = xs.reshape(r // 8, 8, l)                    # sublane-aligned fold: VPU adds only
        acc1_ref[...] += jnp.sum(xr, axis=0)
        acc2_ref[...] += jnp.sum(xr * xr, axis=0)

    # ---- phase 1: finalize stats once, then elementwise apply ---------------
    @pl.when(phase == 1)
    def _apply():
        @pl.when(i == 0)
        def _finalize():
            shift = shift_ref[...]
            # remove contribution of the zero padding (exact; n_pad may be 0)
            s1 = jnp.sum(acc1_ref[...], keepdims=True) + n_pad * shift
            s2 = jnp.sum(acc2_ref[...], keepdims=True) - n_pad * (shift * shift)
            mu_s = s1 * inv_n                            # mean of shifted values
            var = (s2 - s1 * mu_s) * inv_nm1             # unbiased (torch.std default)
            mean_ref[...] = shift + mu_s
            istd_ref[...] = jax.lax.rsqrt(var)

        x = x_ref[...]
        d = (x - mean_ref[...]) * istd_ref[...]
        vx, cvy = p_ref[0], p_ref[1]                     # cvy = 1 + vy (folded in wrapper)
        wx, cwy = p_ref[2], p_ref[3]                     # cwy = 1 + wy
        af, mf = p_ref[4], p_ref[5]
        w = d * cwy + wx
        sig = 0.5 * jnp.tanh(0.5 * w) + 0.5              # exact sigmoid, no f32 divide
        v = d * cvy + vx
        o_ref[...] = d * (1.0 + mf * jnp.tanh(d)) + af * (v * sig)


# ---------------------------------------------------------------------------
# Layout / wrapper
# ---------------------------------------------------------------------------
def _choose_layout(total, block_bytes_cap):
    """Lane-dense (rows, lanes) layout, row tile and padded size for a flat array."""
    lanes, padded = 128, None
    for cand in _LANE_CANDIDATES:                        # prefer zero padding
        if total % (8 * cand) == 0:
            lanes, padded = cand, total
            break
    if padded is None:                                   # non-aligned: minimal zero pad
        lanes = 128
        padded = ((total + 8 * lanes - 1) // (8 * lanes)) * (8 * lanes)
    rows = padded // lanes
    # largest row tile that is a multiple of 8, divides rows, and fits the byte cap
    cap_rows = max(8, (block_bytes_cap // (4 * lanes)) // 8 * 8)
    m = rows // 8
    d = 1
    for cand in range(min(m, cap_rows // 8), 0, -1):
        if m % cand == 0:
            d = cand
            break
    return lanes, rows, 8 * d, padded


def _optaeg_ref_flat(flat, params):
    n = flat.size
    mean = jnp.mean(flat)
    std = jnp.sqrt(jnp.sum((flat - mean) ** 2) / (n - 1))   # unbiased (torch.std)
    d = (flat - mean) / std
    vx, vy, wx, wy, af, mf = (params[k] for k in range(6))
    v = d * (1.0 + vy) + vx
    w = d * (1.0 + wy) + wx
    return d * (1.0 + mf * jnp.tanh(d)) + af * (v * jax.nn.sigmoid(w))


def optaeg_v3_forward(data, params, *, block_bytes_cap=_DEFAULT_BLOCK_BYTES):
    """data: (B, C, H, W); params: (6,) f32 [vx, vy, wx, wy, afactor, mfactor]."""
    shape = data.shape
    total = int(data.size)
    flat = data.reshape(-1).astype(jnp.float32)
    params = params.astype(jnp.float32).reshape(-1)

    # Smaller than one (8,128) tile: launch + padding overhead dominates; let XLA
    # fuse the plain expression.  Everything >= one tile uses the fused kernel.
    if total < 8 * 128:
        return _optaeg_ref_flat(flat, params).reshape(shape)

    lanes, rows, row_tile, padded = _choose_layout(total, block_bytes_cap)
    n_pad = padded - total
    if n_pad:
        # TODO(synk): masked last-tile handling would avoid this full-array copy for
        # non-1024-aligned sizes; aligned sizes (the common case) take the zero-copy path.
        flat = jnp.concatenate([flat, jnp.zeros((n_pad,), jnp.float32)])
    x2d = flat.reshape(rows, lanes)
    n_tiles = rows // row_tile

    # fold the (1 + vy) / (1 + wy) affines once: [vx, 1+vy, wx, 1+wy, af, mf]
    smem_params = params + jnp.array([0.0, 1.0, 0.0, 1.0, 0.0, 0.0], dtype=jnp.float32)

    kernel = functools.partial(
        _fused_kernel,
        inv_n=1.0 / total, inv_nm1=1.0 / (total - 1), n_pad=float(n_pad))

    out2d = pl.pallas_call(
        kernel,
        out_shape=jax.ShapeDtypeStruct((rows, lanes), jnp.float32),
        grid_spec=pltpu.PrefetchScalarGridSpec(
            num_scalar_prefetch=0,
            grid=(2, n_tiles),                                       # (phase, tile)
            in_specs=[
                pl.BlockSpec(memory_space=pltpu.MemorySpace.SMEM),   # 6 scalars
                pl.BlockSpec((row_tile, lanes), lambda p, i: (i, 0)),
            ],
            # phase 0: output block pinned to 0 (never written -> no garbage writeback);
            # phase 1: streams lane-dense blocks, each written exactly once.
            out_specs=pl.BlockSpec((row_tile, lanes), lambda p, i: (p * i, 0)),
            scratch_shapes=[
                pltpu.VMEM((8, lanes), jnp.float32),   # sum(x - shift)
                pltpu.VMEM((8, lanes), jnp.float32),   # sum((x - shift)^2)
                pltpu.VMEM((1, 1), jnp.float32),       # pilot shift
                pltpu.VMEM((1, 1), jnp.float32),       # mean
                pltpu.VMEM((1, 1), jnp.float32),       # inv std
            ],
        ),
        compiler_params=pltpu.CompilerParams(
            dimension_semantics=("arbitrary", "arbitrary")),
        cost_estimate=pl.CostEstimate(
            flops=17 * padded, transcendentals=3 * padded, bytes_accessed=12 * padded),
    )(smem_params, x2d)

    out = out2d.reshape(-1)
    if n_pad:
        out = out[:total]
    return out.reshape(shape)


def optaeg_v3_ref(data, params):
    """Pure-JAX reference mirroring the PyTorch module."""
    shape = data.shape
    flat = data.reshape(-1).astype(jnp.float32)
    return _optaeg_ref_flat(flat, params.astype(jnp.float32)).reshape(shape)


if __name__ == "__main__":
    key = jax.random.PRNGKey(0)
    k_x, k_p = jax.random.split(key)

    # small shapes consistent with a CIFAR-style feature map
    B, C, H, W = 2, 4, 16, 16
    x = jax.random.normal(k_x, (B, C, H, W), dtype=jnp.float32)

    # order: [vx, vy, wx, wy, afactor, mfactor]; perturb defaults so every term contributes
    base = jnp.array([0.0, 1.0, 0.0, 1.0, 0.0, 1.0], dtype=jnp.float32)
    params = base + 0.1 * jax.random.normal(k_p, (6,), dtype=jnp.float32)

    def check(data, **kw):
        out = jax.block_until_ready(optaeg_v3_forward(data, params, **kw))
        ref = optaeg_v3_ref(data, params)
        assert out.shape == data.shape and out.dtype == jnp.float32
        assert jnp.allclose(out, ref, atol=1e-5, rtol=1e-5), (
            f"max abs err {jnp.max(jnp.abs(out - ref))}")

    check(x)                                                          # aligned, single tile
    check(jax.random.normal(key, (8, 8, 16, 16), jnp.float32),        # multi-tile accumulation
          block_bytes_cap=32 * 1024)
    check(jax.random.normal(k_p, (2, 3, 20, 20), jnp.float32))        # padded-tail fallback
    print("KERNEL_OK")
</pallas_src>

<mosaic_0001>
module attributes {stable_mosaic.version = 11 : i64} {
  func.func @_fused_kernel(%arg0: i32, %arg1: i32, %arg2: memref<6xf32, #tpu.memory_space<smem>>, %arg3: memref<8x256xf32, #tpu.memory_space<vmem>>, %arg4: memref<8x256xf32, #tpu.memory_space<vmem>>, %arg5: memref<8x256xf32, #tpu.memory_space<vmem>>, %arg6: memref<8x256xf32, #tpu.memory_space<vmem>>, %arg7: memref<1x1xf32, #tpu.memory_space<vmem>>, %arg8: memref<1x1xf32, #tpu.memory_space<vmem>>, %arg9: memref<1x1xf32, #tpu.memory_space<vmem>>) attributes {dimension_semantics = [#tpu.dimension_semantics<arbitrary>, #tpu.dimension_semantics<arbitrary>], iteration_bounds = array<i64: 2, 1>, scalar_prefetch = 0 : i64, scratch_operands = 5 : i64, tpu.core_type = #tpu.core_type<tc>, window_params = [{transform_indices = @transform_0, window_bounds = array<i64: 6>}, {transform_indices = @transform_1, window_bounds = array<i64: 8, 256>}, {transform_indices = @transform_2, window_bounds = array<i64: 8, 256>}]} {
    %c0_i32 = arith.constant 0 : i32
    %0 = arith.cmpi eq, %arg0, %c0_i32 : i32
    %1 = arith.extui %0 : i1 to i32
    %c0_i32_0 = arith.constant 0 : i32
    %2 = arith.cmpi ne, %1, %c0_i32_0 : i32
    scf.if %2 {
      %c0 = arith.constant 0 : index
      %c0_2 = arith.constant 0 : index
      %6 = vector.load %arg3[%c0, %c0_2] : memref<8x256xf32, #tpu.memory_space<vmem>>, vector<8x256xf32>
      %c0_i32_3 = arith.constant 0 : i32
      %7 = arith.cmpi eq, %arg1, %c0_i32_3 : i32
      %8 = arith.extui %7 : i1 to i32
      %c0_i32_4 = arith.constant 0 : i32
      %9 = arith.cmpi ne, %8, %c0_i32_4 : i32
      scf.if %9 {
        %23 = vector.extract_strided_slice %6 {offsets = [0, 0], sizes = [1, 1], strides = [1, 1]} : vector<8x256xf32> to vector<1x1xf32>
        %c0_16 = arith.constant 0 : index
        %c0_17 = arith.constant 0 : index
        %24 = vector.load %arg7[%c0_16, %c0_17] : memref<1x1xf32, #tpu.memory_space<vmem>>, vector<1x1xf32>
        tpu.vector_store %arg7[%c0_16, %c0_17], %23 {strides = array<i32>} : memref<1x1xf32, #tpu.memory_space<vmem>>, vector<1x1xf32>,
        %cst_18 = arith.constant 0.000000e+00 : f32
        %25 = vector.broadcast %cst_18 : f32 to vector<8x256xf32>
        %c0_19 = arith.constant 0 : index
        %c0_20 = arith.constant 0 : index
        %26 = vector.load %arg5[%c0_19, %c0_20] : memref<8x256xf32, #tpu.memory_space<vmem>>, vector<8x256xf32>
        tpu.vector_store %arg5[%c0_19, %c0_20], %25 {strides = array<i32>} : memref<8x256xf32, #tpu.memory_space<vmem>>, vector<8x256xf32>,
        %cst_21 = arith.constant 0.000000e+00 : f32
        %27 = vector.broadcast %cst_21 : f32 to vector<8x256xf32>
        %c0_22 = arith.constant 0 : index
        %c0_23 = arith.constant 0 : index
        %28 = vector.load %arg6[%c0_22, %c0_23] : memref<8x256xf32, #tpu.memory_space<vmem>>, vector<8x256xf32>
        tpu.vector_store %arg6[%c0_22, %c0_23], %27 {strides = array<i32>} : memref<8x256xf32, #tpu.memory_space<vmem>>, vector<8x256xf32>,
      } else {
      }
      %c0_5 = arith.constant 0 : index
      %c0_6 = arith.constant 0 : index
      %10 = vector.load %arg7[%c0_5, %c0_6] : memref<1x1xf32, #tpu.memory_space<vmem>>, vector<1x1xf32>
      %11 = vector.broadcast %10 : vector<1x1xf32> to vector<8x256xf32>
      %12 = arith.subf %6, %11 : vector<8x256xf32>
      %13 = vector.shape_cast %12 : vector<8x256xf32> to vector<1x8x256xf32>
      %c0_7 = arith.constant 0 : index
      %c0_8 = arith.constant 0 : index
      %14 = vector.load %arg5[%c0_7, %c0_8] : memref<8x256xf32, #tpu.memory_space<vmem>>, vector<8x256xf32>
      %cst = arith.constant dense<0.000000e+00> : vector<8x256xf32>
      %15 = vector.multi_reduction <add>, %13, %cst [0] : vector<1x8x256xf32> to vector<8x256xf32>
      %16 = arith.addf %14, %15 : vector<8x256xf32>
      %c0_9 = arith.constant 0 : index
      %c0_10 = arith.constant 0 : index
      %17 = vector.load %arg5[%c0_9, %c0_10] : memref<8x256xf32, #tpu.memory_space<vmem>>, vector<8x256xf32>
      tpu.vector_store %arg5[%c0_9, %c0_10], %16 {strides = array<i32>} : memref<8x256xf32, #tpu.memory_space<vmem>>, vector<8x256xf32>,
      %c0_11 = arith.constant 0 : index
      %c0_12 = arith.constant 0 : index
      %18 = vector.load %arg6[%c0_11, %c0_12] : memref<8x256xf32, #tpu.memory_space<vmem>>, vector<8x256xf32>
      %19 = arith.mulf %13, %13 : vector<1x8x256xf32>
      %cst_13 = arith.constant dense<0.000000e+00> : vector<8x256xf32>
      %20 = vector.multi_reduction <add>, %19, %cst_13 [0] : vector<1x8x256xf32> to vector<8x256xf32>
      %21 = arith.addf %18, %20 : vector<8x256xf32>
      %c0_14 = arith.constant 0 : index
      %c0_15 = arith.constant 0 : index
      %22 = vector.load %arg6[%c0_14, %c0_15] : memref<8x256xf32, #tpu.memory_space<vmem>>, vector<8x256xf32>
      tpu.vector_store %arg6[%c0_14, %c0_15], %21 {strides = array<i32>} : memref<8x256xf32, #tpu.memory_space<vmem>>, vector<8x256xf32>,
    } else {
    }
    %c1_i32 = arith.constant 1 : i32
    %3 = arith.cmpi eq, %arg0, %c1_i32 : i32
    %4 = arith.extui %3 : i1 to i32
    %c0_i32_1 = arith.constant 0 : i32
    %5 = arith.cmpi ne, %4, %c0_i32_1 : i32
    scf.if %5 {
      %c0_i32_2 = arith.constant 0 : i32
      %6 = arith.cmpi eq, %arg1, %c0_i32_2 : i32
      %7 = arith.extui %6 : i1 to i32
      %c0_i32_3 = arith.constant 0 : i32
      %8 = arith.cmpi ne, %7, %c0_i32_3 : i32
      scf.if %8 {
        %c0_15 = arith.constant 0 : index
        %c0_16 = arith.constant 0 : index
        %48 = vector.load %arg7[%c0_15, %c0_16] : memref<1x1xf32, #tpu.memory_space<vmem>>, vector<1x1xf32>
        %c0_17 = arith.constant 0 : index
        %c0_18 = arith.constant 0 : index
        %49 = vector.load %arg5[%c0_17, %c0_18] : memref<8x256xf32, #tpu.memory_space<vmem>>, vector<8x256xf32>
        %50 = vector.shape_cast %49 : vector<8x256xf32> to vector<1x8x256xf32>
        %cst_19 = arith.constant dense<0.000000e+00> : vector<1xf32>
        %51 = vector.multi_reduction <add>, %50, %cst_19 [1, 2] : vector<1x8x256xf32> to vector<1xf32>
        %52 = vector.shape_cast %51 : vector<1xf32> to vector<1x1x1xf32>
        %53 = vector.extract %52[0, 0, 0] : f32 from vector<1x1x1xf32>
        %54 = vector.broadcast %53 : f32 to vector<1x1xf32>
        %cst_20 = arith.constant 0.000000e+00 : f32
        %55 = vector.broadcast %cst_20 : f32 to vector<1x1xf32>
        %56 = arith.mulf %55, %48 : vector<1x1xf32>
        %57 = arith.addf %54, %56 : vector<1x1xf32>
        %c0_21 = arith.constant 0 : index
        %c0_22 = arith.constant 0 : index
        %58 = vector.load %arg6[%c0_21, %c0_22] : memref<8x256xf32, #tpu.memory_space<vmem>>, vector<8x256xf32>
        %59 = vector.shape_cast %58 : vector<8x256xf32> to vector<1x8x256xf32>
        %cst_23 = arith.constant dense<0.000000e+00> : vector<1xf32>
        %60 = vector.multi_reduction <add>, %59, %cst_23 [1, 2] : vector<1x8x256xf32> to vector<1xf32>
        %61 = vector.shape_cast %60 : vector<1xf32> to vector<1x1x1xf32>
        %62 = vector.extract %61[0, 0, 0] : f32 from vector<1x1x1xf32>
        %63 = vector.broadcast %62 : f32 to vector<1x1xf32>
        %64 = arith.mulf %48, %48 : vector<1x1xf32>
        %cst_24 = arith.constant 0.000000e+00 : f32
        %65 = vector.broadcast %cst_24 : f32 to vector<1x1xf32>
        %66 = arith.mulf %65, %64 : vector<1x1xf32>
        %67 = arith.subf %63, %66 : vector<1x1xf32>
        %cst_25 = arith.constant 4.8828125E-4 : f32
        %68 = vector.broadcast %cst_25 : f32 to vector<1x1xf32>
        %69 = arith.mulf %57, %68 : vector<1x1xf32>
        %70 = arith.mulf %57, %69 : vector<1x1xf32>
        %71 = arith.subf %67, %70 : vector<1x1xf32>
        %cst_26 = arith.constant 4.88519785E-4 : f32
        %72 = vector.broadcast %cst_26 : f32 to vector<1x1xf32>
        %73 = arith.mulf %71, %72 : vector<1x1xf32>
        %74 = arith.addf %48, %69 : vector<1x1xf32>
        %c0_27 = arith.constant 0 : index
        %c0_28 = arith.constant 0 : index
        %75 = vector.load %arg8[%c0_27, %c0_28] : memref<1x1xf32, #tpu.memory_space<vmem>>, vector<1x1xf32>
        tpu.vector_store %arg8[%c0_27, %c0_28], %74 {strides = array<i32>} : memref<1x1xf32, #tpu.memory_space<vmem>>, vector<1x1xf32>,
        %76 = math.rsqrt %73 : vector<1x1xf32>
        %c0_29 = arith.constant 0 : index
        %c0_30 = arith.constant 0 : index
        %77 = vector.load %arg9[%c0_29, %c0_30] : memref<1x1xf32, #tpu.memory_space<vmem>>, vector<1x1xf32>
        tpu.vector_store %arg9[%c0_29, %c0_30], %76 {strides = array<i32>} : memref<1x1xf32, #tpu.memory_space<vmem>>, vector<1x1xf32>,
      } else {
      }
      %c0 = arith.constant 0 : index
      %c0_4 = arith.constant 0 : index
      %9 = vector.load %arg3[%c0, %c0_4] : memref<8x256xf32, #tpu.memory_space<vmem>>, vector<8x256xf32>
      %c0_5 = arith.constant 0 : index
      %c0_6 = arith.constant 0 : index
      %10 = vector.load %arg8[%c0_5, %c0_6] : memref<1x1xf32, #tpu.memory_space<vmem>>, vector<1x1xf32>
      %11 = vector.broadcast %10 : vector<1x1xf32> to vector<8x256xf32>
      %12 = arith.subf %9, %11 : vector<8x256xf32>
      %c0_7 = arith.constant 0 : index
      %c0_8 = arith.constant 0 : index
      %13 = vector.load %arg9[%c0_7, %c0_8] : memref<1x1xf32, #tpu.memory_space<vmem>>, vector<1x1xf32>
      %14 = vector.broadcast %13 : vector<1x1xf32> to vector<8x256xf32>
      %15 = arith.mulf %12, %14 : vector<8x256xf32>
      %c0_9 = arith.constant 0 : index
      %16 = memref.load %arg2[%c0_9] : memref<6xf32, #tpu.memory_space<smem>>
      %c1 = arith.constant 1 : index
      %17 = memref.load %arg2[%c1] : memref<6xf32, #tpu.memory_space<smem>>
      %c2 = arith.constant 2 : index
      %18 = memref.load %arg2[%c2] : memref<6xf32, #tpu.memory_space<smem>>
      %c3 = arith.constant 3 : index
      %19 = memref.load %arg2[%c3] : memref<6xf32, #tpu.memory_space<smem>>
      %c4 = arith.constant 4 : index
      %20 = memref.load %arg2[%c4] : memref<6xf32, #tpu.memory_space<smem>>
      %c5 = arith.constant 5 : index
      %21 = memref.load %arg2[%c5] : memref<6xf32, #tpu.memory_space<smem>>
      %22 = vector.broadcast %19 : f32 to vector<8x256xf32>
      %23 = arith.mulf %15, %22 : vector<8x256xf32>
      %24 = vector.broadcast %18 : f32 to vector<8x256xf32>
      %25 = arith.addf %23, %24 : vector<8x256xf32>
      %cst = arith.constant 5.000000e-01 : f32
      %26 = vector.broadcast %cst : f32 to vector<8x256xf32>
      %27 = arith.mulf %26, %25 : vector<8x256xf32>
      %28 = math.tanh %27 : vector<8x256xf32>
      %cst_10 = arith.constant 5.000000e-01 : f32
      %29 = vector.broadcast %cst_10 : f32 to vector<8x256xf32>
      %30 = arith.mulf %29, %28 : vector<8x256xf32>
      %cst_11 = arith.constant 5.000000e-01 : f32
      %31 = vector.broadcast %cst_11 : f32 to vector<8x256xf32>
      %32 = arith.addf %30, %31 : vector<8x256xf32>
      %33 = vector.broadcast %17 : f32 to vector<8x256xf32>
      %34 = arith.mulf %15, %33 : vector<8x256xf32>
      %35 = vector.broadcast %16 : f32 to vector<8x256xf32>
      %36 = arith.addf %34, %35 : vector<8x256xf32>
      %37 = math.tanh %15 : vector<8x256xf32>
      %38 = vector.broadcast %21 : f32 to vector<8x256xf32>
      %39 = arith.mulf %38, %37 : vector<8x256xf32>
      %cst_12 = arith.constant 1.000000e+00 : f32
      %40 = vector.broadcast %cst_12 : f32 to vector<8x256xf32>
      %41 = arith.addf %40, %39 : vector<8x256xf32>
      %42 = arith.mulf %15, %41 : vector<8x256xf32>
      %43 = arith.mulf %36, %32 : vector<8x256xf32>
      %44 = vector.broadcast %20 : f32 to vector<8x256xf32>
      %45 = arith.mulf %44, %43 : vector<8x256xf32>
      %46 = arith.addf %42, %45 : vector<8x256xf32>
      %c0_13 = arith.constant 0 : index
      %c0_14 = arith.constant 0 : index
      %47 = vector.load %arg4[%c0_13, %c0_14] : memref<8x256xf32, #tpu.memory_space<vmem>>, vector<8x256xf32>
      tpu.vector_store %arg4[%c0_13, %c0_14], %46 {strides = array<i32>} : memref<8x256xf32, #tpu.memory_space<vmem>>, vector<8x256xf32>,
    } else {
    }
    return
  }
  func.func @transform_0(%arg0: i32, %arg1: i32) -> i32 {
    %c0_i32 = arith.constant 0 : i32
    %c0_i32_0 = arith.constant 0 : i32
    return %c0_i32 : i32
  }
  func.func @transform_1(%arg0: i32, %arg1: i32) -> (i32, i32) {
    %c0_i32 = arith.constant 0 : i32
    %c0_i32_0 = arith.constant 0 : i32
    return %arg1, %c0_i32 : i32, i32
  }
  func.func @transform_2(%arg0: i32, %arg1: i32) -> (i32, i32) {
    %0 = arith.muli %arg0, %arg1 : i32
    %c0_i32 = arith.constant 0 : i32
    %c0_i32_0 = arith.constant 0 : i32
    return %0, %c0_i32 : i32, i32
  }
}

</mosaic_0001>

<llo_original>
// kernel: tpu_custom_call.1
$region0: #{tpu_custom_call.1}
  #allocation0 [shape = 'u32[]', space=smem, size = 0x4, offset = 0x4, fixed_abs, tag = 'smem constant byte address 0x4 - core index']
  #allocation1 [shape = 'u32[144,128]{1,0:T(1,128)}', space=vmem, size = 0x12000, scoped, tag = 'internal scratch']
  #allocation2 [shape = 'f32[8,256]{1,0:T(8,128)}', space=vmem, size = 0x2000, scoped, tag = 'scratch operand']
  #allocation3 [shape = 'f32[8,256]{1,0:T(8,128)}', space=vmem, size = 0x2000, scoped, tag = 'scratch operand']
  #allocation4 [shape = 'f32[1,1]{1,0:T(1,128)}', space=vmem, size = 0x200, scoped, tag = 'scratch operand']
  #allocation5 [shape = 'f32[1,1]{1,0:T(1,128)}', space=vmem, size = 0x200, scoped, tag = 'scratch operand']
  #allocation6 [shape = 'f32[1,1]{1,0:T(1,128)}', space=vmem, size = 0x200, scoped, tag = 'scratch operand']
  %s0 = inlined_call_operand.hbm [shape: f32[6], index: 0, kind: input, shape index: {}]
  %s1 = inlined_call_operand.hbm [shape: f32[8,256], index: 1, kind: input, shape index: {}]
  %s2 = inlined_call_operand.hbm [shape: f32[8,256], index: 2, kind: output, shape index: {}]
  %s3 = sld [smem:[#allocation0]]
  $region65: #{tpu_custom_call.1} parent=0
    _
  %s5 = ssub.s32 1, %s3
  %s6 = scalar_select 0, %s5, %s3
  $region1: #{tpu_custom_call.1} parent=0
    #allocation7 [shape = 'u8[512]{0}', space=smem, size = 0x200, scoped, tag = 'input window, operand 0, single buffered']
    #allocation8 [shape = 's32[2]{0}', space=sflag, size = 0x8, scoped, tag = 'scoped memory for tpu_custom_call.1']
    #allocation9 [shape = 's32[2]{0}', space=sflag, size = 0x8, scoped, tag = 'scoped memory for tpu_custom_call.1']
    #allocation10 [shape = 's32[2]{0}', space=sflag, size = 0x8, scoped, tag = 'scoped memory for tpu_custom_call.1']
    #allocation11 [shape = 'u8[8192]{0}', space=vmem, size = 0x2000, scoped, tag = 'input window, operand 1, single buffered']
    #allocation12 [shape = 'u8[16384]{0}', space=vmem, size = 0x4000, scoped, tag = 'output window, operand 0']
    %7 = vsyncpa [#allocation10], 0
    %8 = vsyncpa [#allocation8], 0
    %9 = vsyncpa [#allocation9], 0
    %s10 = scalar_lea.sflag [#allocation9], 1
    %11 = vsyncpa %s10, 0
    loop: start=0, step=1, limit=4
    $region2: #{tpu_custom_call.1} parent=1 // loop_pre_header
      _
    $region3: #{tpu_custom_call.1} parent=1 // loop_header
      %s13 = sphi 0, %s17
      %p14 = scmp.ge.s32.totalorder %s13, 4
      %s20 = sphi 0, %s32
      %s21 = sphi 0, %s28
      %s22 = sphi 0, %s20
      %s23 = sphi 0, %s21
      %s24 = sphi 0, %s22
      %s25 = sphi 0, %s23
      %s33 = sphi 0, %s33
      %s35 = sphi 0, %s33
      %s36 = sphi 0, %s35
      %s50 = sphi 0, %s36
      %s56 = sphi 0, %s58
      %s59 = sphi 0, %s56
      %s60 = sphi 0, %s59
      %s76 = sphi 0, %s60
      %s84 = sphi 0, %s86
      %s87 = sphi 0, %s84
      %s88 = sphi 0, %s87
      %s104 = sphi 0, %s88
    $region4: #{tpu_custom_call.1} parent=1 // loop_header_branch
      %16 = sbr.rel (%p14) target = $region8
    $region5: #{tpu_custom_call.1} parent=1 // loop_body
      %s18 = ssub.s32 %s13, 1
      %s19 = ssub.s32 %s13, 2
      %s26 = sadd.s32 1, %s21
      %p27 = scmp.ge.s32.totalorder %s26, 1
      %s28 = scalar_select %p27, 0, %s26
      %s29 = sadd.s32 1, %s20
      %s30 = scalar_select %p27, %s29, %s20
      %p31 = scmp.ge.s32.totalorder %s30, 2
      %s32 = scalar_select %p31, 0, %s30
      %s34 = sadd.s32 %s33, 1
      %p37 = scmp.eq.s32.totalorder %s13, 1
      %p38 = scmp.ne.s32.totalorder %s33, %s35
      %p39 = scmp.eq.s32.totalorder %s13, 0
      %p40 = por %p38, %p39
      %p41 = scmp.ne.s32.totalorder %s33, %s35
      %p42 = scmp.eq.s32.totalorder %s18, 1
      %p43 = por %p41, %p42
      %p44 = scmp.ne.s32.totalorder %s35, %s36
      %p45 = scmp.eq.s32.totalorder %s18, 0
      %p46 = por %p44, %p45
      %p47 = scmp.ne.s32.totalorder %s35, %s36
      %p48 = scmp.eq.s32.totalorder %s19, 1
      %p49 = por %p47, %p48
      %p51 = scmp.ne.s32.totalorder %s36, %s50
      %p52 = scmp.eq.s32.totalorder %s19, 0
      %p53 = por %p51, %p52
      %s54 = ssub.s32 %s21, %s28
      %p55 = scmp.eq.s32.totalorder %s54, 0
      %s57 = sadd.s32 %s56, 1
      %s58 = scalar_select %p55, %s56, %s57
      %p61 = pneg %p55
      %p62 = scmp.eq.s32.totalorder %s13, 1
      %p63 = por %p61, %p62
      %p64 = scmp.ne.s32.totalorder %s56, %s59
      %p65 = scmp.eq.s32.totalorder %s13, 0
      %p66 = por %p64, %p65
      %p67 = scmp.ne.s32.totalorder %s56, %s59
      %p68 = scmp.eq.s32.totalorder %s18, 1
      %p69 = por %p67, %p68
      %p70 = scmp.ne.s32.totalorder %s59, %s60
      %p71 = scmp.eq.s32.totalorder %s18, 0
      %p72 = por %p70, %p71
      %p73 = scmp.ne.s32.totalorder %s59, %s60
      %p74 = scmp.eq.s32.totalorder %s19, 1
      %p75 = por %p73, %p74
      %p77 = scmp.ne.s32.totalorder %s60, %s76
      %p78 = scmp.eq.s32.totalorder %s19, 0
      %p79 = por %p77, %p78
      %s80 = smul.u32 %s20, %s21
      %s81 = smul.u32 %s32, %s28
      %s82 = ssub.s32 %s80, %s81
      %p83 = scmp.eq.s32.totalorder %s82, 0
      %s85 = sadd.s32 %s84, 1
      %s86 = scalar_select %p83, %s84, %s85
      %p89 = pneg %p83
      %p90 = scmp.eq.s32.totalorder %s13, 1
      %p91 = por %p89, %p90
      %p92 = scmp.ne.s32.totalorder %s84, %s87
      %p93 = scmp.eq.s32.totalorder %s13, 0
      %p94 = por %p92, %p93
      %p95 = scmp.ne.s32.totalorder %s84, %s87
      %p96 = scmp.eq.s32.totalorder %s18, 1
      %p97 = por %p95, %p96
      %p98 = scmp.ne.s32.totalorder %s87, %s88
      %p99 = scmp.eq.s32.totalorder %s18, 0
      %p100 = por %p98, %p99
      %p101 = scmp.ne.s32.totalorder %s87, %s88
      %p102 = scmp.eq.s32.totalorder %s19, 1
      %p103 = por %p101, %p102
      %p105 = scmp.ne.s32.totalorder %s88, %s104
      %p106 = scmp.eq.s32.totalorder %s19, 0
      %p107 = por %p105, %p106
      %p108 = scmp.le.s32.totalorder 1, %s13
      %p109 = scmp.lt.s32.totalorder %s13, 3
      %p110 = pnand %p108, %p109
      %p111 = pneg %p110
      // Predicated region
      $region9: #{tpu_custom_call.1} parent=5 // pred_check
        _
      $region10: #{tpu_custom_call.1} parent=5 // pred_check_branch
        %113 = sbr.rel (%p110) target = $region12
      $region11: #{tpu_custom_call.1} parent=5 // pred_region
        %s114 = ssub.s32 %s13, 1
        // Predicated region
        $region13: #{tpu_custom_call.1} parent=11 // pred_check
          %p115 = pneg %p46
        $region14: #{tpu_custom_call.1} parent=11 // pred_check_branch
          %117 = sbr.rel (%p115) target = $region16
        $region15: #{tpu_custom_call.1} parent=11 // pred_region
          %s119 = ssub.s32 16, 16
          %120 = vsyncadd [#allocation10], %s119
          %123 = dma.hbm_to_smem %s0, 16, [#allocation7], [#allocation10]
        $region16: #{tpu_custom_call.1} parent=11 // pred_fallthru
          _
        // Predicated region
        $region17: #{tpu_custom_call.1} parent=11 // pred_check
          %p124 = pneg %p72
        $region18: #{tpu_custom_call.1} parent=11 // pred_check_branch
          %126 = sbr.rel (%p124) target = $region20
        $region19: #{tpu_custom_call.1} parent=11 // pred_region
          %s128 = ssub.s32 256, 256
          %129 = vsyncadd [#allocation8], %s128
          %s130 = smul.addr %s23, 2
          %s131 = smul.addr %s130, 128
          %s132 = scalar_lea.hbm %s1, %s131
          %s134 = sshll.u32 [#allocation11], 4
          %s135 = int_to_ptr.vmem [resolvable:$true] %s134
          %137 = dma.hbm_to_vmem [thread:$0]  %s132, 256, %s135, [#allocation8]
        $region20: #{tpu_custom_call.1} parent=11 // pred_fallthru
          _
      $region12: #{tpu_custom_call.1} parent=5 // pred_fallthru
        _
      %p138 = scmp.lt.s32.totalorder %s13, 2
      // Predicated region
      $region21: #{tpu_custom_call.1} parent=5 // pred_check
        %p139 = pneg %p138
      $region22: #{tpu_custom_call.1} parent=5 // pred_check_branch
        %141 = sbr.rel (%p139) target = $region24
      $region23: #{tpu_custom_call.1} parent=5 // pred_region
        _
      $region24: #{tpu_custom_call.1} parent=5 // pred_fallthru
        _
      %p142 = scmp.le.s32.totalorder 1, %s13
      %p143 = scmp.lt.s32.totalorder %s13, 3
      %p144 = pnand %p142, %p143
      %p145 = pneg %p144
      // Predicated region
      $region25: #{tpu_custom_call.1} parent=5 // pred_check
        _
      $region26: #{tpu_custom_call.1} parent=5 // pred_check_branch
        %147 = sbr.rel (%p144) target = $region28
      $region27: #{tpu_custom_call.1} parent=5 // pred_region
        %s148 = ssub.s32 %s13, 1
        // Predicated region
        $region29: #{tpu_custom_call.1} parent=27 // pred_check
          %p149 = pneg %p46
        $region30: #{tpu_custom_call.1} parent=27 // pred_check_branch
          %151 = sbr.rel (%p149) target = $region32
        $region31: #{tpu_custom_call.1} parent=27 // pred_region
          %152 = dma.done [#allocation10], 16
        $region32: #{tpu_custom_call.1} parent=27 // pred_fallthru
          _
        // Predicated region
        $region33: #{tpu_custom_call.1} parent=27 // pred_check
          %p153 = pneg %p72
        $region34: #{tpu_custom_call.1} parent=27 // pred_check_branch
          %155 = sbr.rel (%p153) target = $region36
        $region35: #{tpu_custom_call.1} parent=27 // pred_region
          %156 = dma.done [#allocation8], 256
        $region36: #{tpu_custom_call.1} parent=27 // pred_fallthru
          _
        %157 = sfence
        %p158 = pneg %p46
        %p159 = pneg %p43
        %p160 = pneg %p72
        %p161 = pneg %p69
        %p162 = pneg %p100
        %p163 = pneg %p97
        %s164 = sand.u32 %s87, 1
        %s165 = scalar_lea.sflag [#allocation9], %s164
        %s166 = sand.u32 %s87, 1
        %s167 = smul.addr %s166, 16
        %s168 = scalar_lea.vmem [#allocation12], %s167
        %s169 = smul.u32 %s22, %s23
        %p170 = scmp.eq.s32.totalorder %s22, 0
        // Predicated region
        $region37: #{tpu_custom_call.1} parent=27 // pred_check
          %p171 = pneg %p170
        $region38: #{tpu_custom_call.1} parent=27 // pred_check_branch
          %173 = sbr.rel (%p171) target = $region40
        $region39: #{tpu_custom_call.1} parent=27 // pred_region
          %v174 = vld [vmem:[#allocation11] sm:$0xff]
          %v175 = vld [vmem:[#allocation11 + $0x8] sm:$0xff]
          %p176 = scmp.eq.s32.totalorder %s23, 0
          // Predicated region
          $region41: #{tpu_custom_call.1} parent=39 // pred_check
            %p177 = pneg %p176
          $region42: #{tpu_custom_call.1} parent=39 // pred_check_branch
            %179 = sbr.rel (%p177) target = $region44
          $region43: #{tpu_custom_call.1} parent=39 // pred_region
            %vm180 = vcmask 0
            %181 = vst.msk [vmem:[#allocation4] sm:$0x1] %vm180, %v174
            %182 = vst [vmem:[#allocation2] sm:$0xff] 0.0
            %183 = vst [vmem:[#allocation2 + $0x8] sm:$0xff] 0.0
            %184 = vst [vmem:[#allocation3] sm:$0xff] 0.0
            %185 = vst [vmem:[#allocation3 + $0x8] sm:$0xff] 0.0
          $region44: #{tpu_custom_call.1} parent=39 // pred_fallthru
            _
          %v186 = vld [vmem:[#allocation4] sm:$0x1]
          %v188 = vlaneseq
          %v189 = vshrl.u32 %v188, 7
          %v190 = vsub.s32 0, %v189
          %v191 = vrot.slane %v186, %v190
          %192 = vset.pattern.permute.xlu0 0
          %193 = vperm.xlu0 %192, %v191
          %v194 = vpop.permute.xlu0 %193
          %v196 = vsub.f32 %v174, %v194
          %v197 = vsub.f32 %v175, %v194
          %v198 = vld [vmem:[#allocation2] sm:$0xff]
          %v199 = vld [vmem:[#allocation2 + $0x8] sm:$0xff]
          %v200 = vadd.f32 %v196, 0.0
          %v201 = vadd.f32 %v197, 0.0
          %v202 = vadd.f32 %v198, %v200
          %v203 = vadd.f32 %v199, %v201
          %204 = vst [vmem:[#allocation2] sm:$0xff] %v202
          %205 = vst [vmem:[#allocation2 + $0x8] sm:$0xff] %v203
          %v206 = vld [vmem:[#allocation3] sm:$0xff]
          %v207 = vld [vmem:[#allocation3 + $0x8] sm:$0xff]
          %v208 = vmul.f32 %v196, %v196
          %v209 = vmul.f32 %v197, %v197
          %v210 = vadd.f32 %v208, 0.0
          %v211 = vadd.f32 %v209, 0.0
          %v212 = vadd.f32 %v206, %v210
          %v213 = vadd.f32 %v207, %v211
          %214 = vst [vmem:[#allocation3] sm:$0xff] %v212
          %215 = vst [vmem:[#allocation3 + $0x8] sm:$0xff] %v213
        $region40: #{tpu_custom_call.1} parent=27 // pred_fallthru
          _
        %p216 = scmp.eq.s32.totalorder %s22, 1
        // Predicated region
        $region45: #{tpu_custom_call.1} parent=27 // pred_check
          %p217 = pneg %p216
        $region46: #{tpu_custom_call.1} parent=27 // pred_check_branch
          %219 = sbr.rel (%p217) target = $region48
        $region47: #{tpu_custom_call.1} parent=27 // pred_region
          %p220 = scmp.eq.s32.totalorder %s23, 0
          // Predicated region
          $region49: #{tpu_custom_call.1} parent=47 // pred_check
            %p221 = pneg %p220
          $region50: #{tpu_custom_call.1} parent=47 // pred_check_branch
            %223 = sbr.rel (%p221) target = $region52
          $region51: #{tpu_custom_call.1} parent=47 // pred_region
            %v224 = vld [vmem:[#allocation4] sm:$0x1]
            %v225 = vld [vmem:[#allocation2] sm:$0xff]
            %v226 = vld [vmem:[#allocation2 + $0x8] sm:$0xff]
            %v227 = vadd.f32 %v225, %v226
            %228 = vadd.xlane.f32.xlu0 %v227
            %v229 = vpop.xlane.xlu0 %228
            %v230 = vrot.slane %v229, 4
            %v231 = vadd.f32 %v229, %v230
            %v232 = vrot.slane %v231, 2
            %v233 = vadd.f32 %v231, %v232
            %v234 = vrot.slane %v233, 1
            %v235 = vadd.f32 %v233, %v234
            %s236 = vtos %v235
            %v237 = vstv %s236
            %v238 = vmul.f32 %v224, 0.0
            %v239 = vadd.f32 %v237, %v238
            %v240 = vld [vmem:[#allocation3] sm:$0xff]
            %v241 = vld [vmem:[#allocation3 + $0x8] sm:$0xff]
            %v242 = vadd.f32 %v240, %v241
            %243 = vadd.xlane.f32.xlu0 %v242
            %v244 = vpop.xlane.xlu0 %243
            %v245 = vrot.slane %v244, 4
            %v246 = vadd.f32 %v244, %v245
            %v247 = vrot.slane %v246, 2
            %v248 = vadd.f32 %v246, %v247
            %v249 = vrot.slane %v248, 1
            %v250 = vadd.f32 %v248, %v249
            %s251 = vtos %v250
            %v252 = vstv %s251
            %v253 = vmul.f32 %v224, %v224
            %v254 = vmul.f32 %v253, 0.0
            %v255 = vsub.f32 %v252, %v254
            %v256 = vmul.f32 %v239, 0.00048828125
            %v257 = vmul.f32 %v239, %v256
            %v258 = vsub.f32 %v255, %v257
            %v259 = vmul.f32 %v258, 0.0004885198
            %v260 = vadd.f32 %v224, %v256
            %vm261 = vcmask 0
            %262 = vst.msk [vmem:[#allocation5] sm:$0x1] %vm261, %v260
            %v263 = vrsqrt.pop %v259
            %264 = vst.msk [vmem:[#allocation6] sm:$0x1] %vm261, %v263
          $region52: #{tpu_custom_call.1} parent=47 // pred_fallthru
            _
          %v265 = vld [vmem:[#allocation11] sm:$0xff]
          %v266 = vld [vmem:[#allocation11 + $0x8] sm:$0xff]
          %v267 = vld [vmem:[#allocation5] sm:$0x1]
          %v269 = vlaneseq
          %v270 = vshrl.u32 %v269, 7
          %v271 = vsub.s32 0, %v270
          %v272 = vrot.slane %v267, %v271
          %273 = vset.pattern.permute.xlu0 0
          %274 = vperm.xlu0 %273, %v272
          %v275 = vpop.permute.xlu0 %274
          %v277 = vsub.f32 %v265, %v275
          %v278 = vsub.f32 %v266, %v275
          %v279 = vld [vmem:[#allocation6] sm:$0x1]
          %v281 = vlaneseq
          %v282 = vshrl.u32 %v281, 7
          %v283 = vsub.s32 0, %v282
          %v284 = vrot.slane %v279, %v283
          %285 = vset.pattern.permute.xlu0 0
          %286 = vperm.xlu0 %285, %v284
          %v287 = vpop.permute.xlu0 %286
          %v289 = vmul.f32 %v277, %v287
          %v290 = vmul.f32 %v278, %v287
          %s291 = sld [smem:[#allocation7]]
          %s292 = sld [smem:[#allocation7 + $0x1]]
          %s293 = sld [smem:[#allocation7 + $0x2]]
          %s294 = sld [smem:[#allocation7 + $0x3]]
          %s295 = sld [smem:[#allocation7 + $0x4]]
          %s296 = sld [smem:[#allocation7 + $0x5]]
          %v297 = vstv %s294
          %v298 = vmul.f32 %v289, %v297
          %v299 = vmul.f32 %v290, %v297
          %v300 = vstv %s293
          %v301 = vadd.f32 %v298, %v300
          %v302 = vadd.f32 %v299, %v300
          %v303 = vmul.f32 %v301, 0.5
          %v304 = vmul.f32 %v302, 0.5
          %v305 = vtanh.pop %v303
          %v306 = vtanh.pop %v304
          %v307 = vmul.f32 %v305, 0.5
          %v308 = vmul.f32 %v306, 0.5
          %v309 = vadd.f32 %v307, 0.5
          %v310 = vadd.f32 %v308, 0.5
          %v311 = vstv %s292
          %v312 = vmul.f32 %v289, %v311
          %v313 = vmul.f32 %v290, %v311
          %v314 = vstv %s291
          %v315 = vadd.f32 %v312, %v314
          %v316 = vadd.f32 %v313, %v314
          %v317 = vtanh.pop %v289
          %v318 = vtanh.pop %v290
          %v319 = vstv %s296
          %v320 = vmul.f32 %v319, %v317
          %v321 = vmul.f32 %v319, %v318
          %v322 = vadd.f32 %v320, 1.0
          %v323 = vadd.f32 %v321, 1.0
          %v324 = vmul.f32 %v289, %v322
          %v325 = vmul.f32 %v290, %v323
          %v326 = vmul.f32 %v315, %v309
          %v327 = vmul.f32 %v316, %v310
          %v328 = vstv %s295
          %v329 = vmul.f32 %v328, %v326
          %v330 = vmul.f32 %v328, %v327
          %v331 = vadd.f32 %v324, %v329
          %v332 = vadd.f32 %v325, %v330
          %333 = vst [vmem:[%s168] sm:$0xff] %v331
          %334 = vst [vmem:[%s168 + $0x8] sm:$0xff] %v332
        $region48: #{tpu_custom_call.1} parent=27 // pred_fallthru
          _
        %s335 = sand.u32 %s87, 1
        %s336 = scalar_lea.sflag [#allocation9], %s335
        %s337 = sand.u32 %s87, 1
        %s338 = smul.addr %s337, 16
        %s339 = scalar_lea.vmem [#allocation12], %s338
        // Predicated region
        $region53: #{tpu_custom_call.1} parent=27 // pred_check
          %p340 = pneg %p97
        $region54: #{tpu_custom_call.1} parent=27 // pred_check_branch
          %342 = sbr.rel (%p340) target = $region56
        $region55: #{tpu_custom_call.1} parent=27 // pred_region
          %s343 = smul.u32 %s22, %s23
          %s345 = ssub.s32 256, 256
          %346 = vsyncadd %s336, %s345
          %s347 = smul.addr %s343, 2
          %s348 = smul.addr %s347, 128
          %s349 = scalar_lea.hbm %s2, %s348
          %s351 = sshll.u32 %s339, 4
          %s352 = int_to_ptr.vmem [resolvable:$true] %s351
          %354 = dma.vmem_to_hbm [thread:$0]  %s352, 256, %s349, %s336
        $region56: #{tpu_custom_call.1} parent=27 // pred_fallthru
          _
      $region28: #{tpu_custom_call.1} parent=5 // pred_fallthru
        _
      %p355 = scmp.le.s32.totalorder 2, %s13
      // Predicated region
      $region57: #{tpu_custom_call.1} parent=5 // pred_check
        %p356 = pneg %p355
      $region58: #{tpu_custom_call.1} parent=5 // pred_check_branch
        %358 = sbr.rel (%p356) target = $region60
      $region59: #{tpu_custom_call.1} parent=5 // pred_region
        %s359 = ssub.s32 %s13, 2
        // Predicated region
        $region61: #{tpu_custom_call.1} parent=59 // pred_check
          %p360 = pneg %p103
        $region62: #{tpu_custom_call.1} parent=59 // pred_check_branch
          %362 = sbr.rel (%p360) target = $region64
        $region63: #{tpu_custom_call.1} parent=59 // pred_region
          %s363 = sand.u32 %s88, 1
          %s364 = scalar_lea.sflag [#allocation9], %s363
          %s365 = sand.u32 %s88, 1
          %s366 = smul.addr %s365, 16
          %s367 = scalar_lea.vmem [#allocation12], %s366
          %368 = dma.done %s364, 256
        $region64: #{tpu_custom_call.1} parent=59 // pred_fallthru
          _
      $region60: #{tpu_custom_call.1} parent=5 // pred_fallthru
        _
    $region6: #{tpu_custom_call.1} parent=1 // loop_footer
      %s17 = sadd.s32 1, %s13
    $region7: #{tpu_custom_call.1} parent=1 // loop_footer_branch
      %12 = sbr.rel target = $region3
    $region8: #{tpu_custom_call.1} parent=1 // loop_exit
      _
    %369 = vsyncpa [#allocation8], 1
    %s370 = scalar_lea.sflag [#allocation8], 1
    %371 = vsyncpa %s370, 1
    %372 = vsyncpa [#allocation9], 1
    %s373 = scalar_lea.sflag [#allocation9], 1
    %374 = vsyncpa %s373, 1
    %375 = vsyncpa [#allocation10], 1
    %s376 = scalar_lea.sflag [#allocation10], 1
    %377 = vsyncpa %s376, 1

</llo_original>
